<compile_context>
chip_gen: v6e
topology: v6e:2x2x1
jax: 0.10.0
libtpu: 0.0.40
codegen_flags: <defaults>
</compile_context>

<pallas_src>
import functools

import jax
import jax.numpy as jnp
from jax.experimental import pallas as pl
from jax.experimental.pallas import tpu as pltpu


def critic_kernel(x_ref, hidden_ref, const_ref, val_ref, *, S, H):
    x = x_ref[...]            # (B, S)   f32
    h = hidden_ref[0]         # (B, H)   f32  (hidden is (1, B, H); index 0 is free)

    # Static slices into the packed constant slab (zero-cost ref views).
    w_x = const_ref[0:S, :]                       # (S, 4H) x-side gate weights
    w_h = const_ref[S:S + H, :]                   # (H, 4H) h-side gate weights
    b = const_ref[S + H:S + H + 1, :]             # (1, 4H) packed gate bias
    w_out = const_ref[S + H + 1:S + H + 2, 0:H]   # (1, H)  value-head weight
    b_out = const_ref[S + H + 2:S + H + 3, 0:1]   # (1, 1)  value-head bias

    # Two accumulated MXU passes (no wrapper concat, no duplicated h transfer):
    #   columns [0:2H)  = r,z gate preactivations (x- and h-side summed, bias added)
    #   columns [2H:3H) = n gate, x-side preactivation (+ b_in)
    #   columns [3H:4H) = n gate, h-side preactivation (+ b_hn)
    g = jnp.dot(x, w_x, preferred_element_type=jnp.float32)
    g = g + jnp.dot(h, w_h, preferred_element_type=jnp.float32)
    g = g + b                                     # (B, 4H)

    # Gate math stays in f32 on the VPU/EUP (v5e has no bf16 VPU/EUP path).
    rz = jax.nn.sigmoid(g[:, 0:2 * H])            # (B, 2H)
    r = rz[:, 0:H]
    z = rz[:, H:2 * H]
    n = jnp.tanh(g[:, 2 * H:3 * H] + r * g[:, 3 * H:4 * H])
    h_new = (1.0 - z) * n + z * h                 # (B, H)

    # Value head Linear(H -> 1), produced lane-dense as a (1, B) row:
    # (1, H) @ (H, B) -> (1, B), then a single unmasked-ish row store.
    val = jnp.dot(w_out, h_new.T, preferred_element_type=jnp.float32) + b_out
    val_ref[...] = val                            # (1, B)


def init_params(key, state_dim, hidden_dim):
    """Torch-layout parameters, uniform(-1/sqrt(H), 1/sqrt(H)) like nn.GRU/nn.Linear."""
    k = 1.0 / jnp.sqrt(jnp.float32(hidden_dim))
    keys = jax.random.split(key, 6)
    u = lambda kk, shape: jax.random.uniform(kk, shape, jnp.float32, -k, k)
    return {
        "w_ih": u(keys[0], (3 * hidden_dim, state_dim)),
        "w_hh": u(keys[1], (3 * hidden_dim, hidden_dim)),
        "b_ih": u(keys[2], (3 * hidden_dim,)),
        "b_hh": u(keys[3], (3 * hidden_dim,)),
        "w_out": u(keys[4], (1, hidden_dim)),
        "b_out": u(keys[5], (1,)),
    }


def pack_params(params, state_dim, hidden_dim):
    """One-time packing of ALL constants into a single (S+H+3, 4H) slab.

    Row layout:
      rows [0:S)      x-side gate weights   (S, 4H)
      rows [S:S+H)    h-side gate weights   (H, 4H)
      row  S+H        packed gate bias      (1, 4H)
      row  S+H+1      value-head weight     (cols [0:H), rest zero)
      row  S+H+2      value-head bias       (col 0, rest zero)
    Column layout of the 4H gate space:
      [0:H) r   [H:2H) z   [2H:3H) n (x side)   [3H:4H) n (h side)
    """
    S, H = state_dim, hidden_dim
    wih_t = params["w_ih"].T                      # (S, 3H), gate order (r, z, n)
    whh_t = params["w_hh"].T                      # (H, 3H)
    b_ih, b_hh = params["b_ih"], params["b_hh"]

    w_x = jnp.zeros((S, 4 * H), jnp.float32)
    w_x = w_x.at[:, 0:2 * H].set(wih_t[:, 0:2 * H])
    w_x = w_x.at[:, 2 * H:3 * H].set(wih_t[:, 2 * H:3 * H])

    w_h = jnp.zeros((H, 4 * H), jnp.float32)
    w_h = w_h.at[:, 0:2 * H].set(whh_t[:, 0:2 * H])
    w_h = w_h.at[:, 3 * H:4 * H].set(whh_t[:, 2 * H:3 * H])

    b_row = jnp.concatenate([
        b_ih[0:2 * H] + b_hh[0:2 * H],            # r,z biases pre-added
        b_ih[2 * H:3 * H],                        # n gate, x side
        b_hh[2 * H:3 * H],                        # n gate, h side
    ]).reshape(1, 4 * H)

    w_out_row = jnp.zeros((1, 4 * H), jnp.float32).at[0, 0:H].set(
        params["w_out"].reshape(H))
    b_out_row = jnp.zeros((1, 4 * H), jnp.float32).at[0, 0].set(
        params["b_out"].reshape(())[()])

    return jnp.concatenate([w_x, w_h, b_row, w_out_row, b_out_row], axis=0)


def critic_forward(x, hidden, const):
    """x: (B, state_dim), hidden: (1, B, hidden_dim) -> value: (1, B, 1)."""
    B, S = x.shape
    H = hidden.shape[-1]

    vspec = pl.BlockSpec(memory_space=pltpu.MemorySpace.VMEM)

    flops = 2 * B * S * (4 * H) + 2 * B * H * (4 * H) + 2 * B * H + 6 * B * H
    transcendentals = 3 * B * H                   # 2x sigmoid + 1x tanh per unit
    bytes_accessed = 4 * (x.size + hidden.size + const.size + B)

    value_row = pl.pallas_call(
        functools.partial(critic_kernel, S=S, H=H),
        out_shape=jax.ShapeDtypeStruct((1, B), jnp.float32),
        in_specs=[vspec, vspec, vspec],
        out_specs=vspec,
        cost_estimate=pl.CostEstimate(
            flops=int(flops),
            transcendentals=int(transcendentals),
            bytes_accessed=int(bytes_accessed)),
    )(x, hidden, const)

    return value_row.reshape(1, B, 1)             # matches PyTorch (seq=1, B, 1)


def critic_reference(x, hidden, params):
    """Pure-JAX reference (mirrors torch.nn.GRU single step + nn.Linear)."""
    h = hidden[0]
    H = h.shape[-1]
    gi = x @ params["w_ih"].T + params["b_ih"]
    gh = h @ params["w_hh"].T + params["b_hh"]
    r = jax.nn.sigmoid(gi[:, :H] + gh[:, :H])
    z = jax.nn.sigmoid(gi[:, H:2 * H] + gh[:, H:2 * H])
    n = jnp.tanh(gi[:, 2 * H:] + r * gh[:, 2 * H:])
    h_new = (1.0 - z) * n + z * h
    val = h_new @ params["w_out"].T + params["b_out"]
    return val.reshape(1, x.shape[0], 1)


if __name__ == "__main__":
    B, state_dim, hidden_dim = 2, 8, 32

    key = jax.random.PRNGKey(0)
    kx, kh, kp = jax.random.split(key, 3)
    x = jax.random.normal(kx, (B, state_dim), jnp.float32)
    hidden = jax.random.normal(kh, (1, B, hidden_dim), jnp.float32)
    params = init_params(kp, state_dim, hidden_dim)

    const = jax.block_until_ready(pack_params(params, state_dim, hidden_dim))

    fwd = jax.jit(critic_forward)
    value = jax.block_until_ready(fwd(x, hidden, const))

    ref = critic_reference(x, hidden, params)
    assert value.shape == (1, B, 1)
    assert jnp.allclose(value, ref, atol=1e-5, rtol=1e-5)

    print("KERNEL_OK")
</pallas_src>

<mosaic_0001>
module attributes {stable_mosaic.version = 11 : i64} {
  func.func @critic_kernel(%arg0: memref<2x8xf32, #tpu.memory_space<vmem>>, %arg1: memref<1x2x32xf32, #tpu.memory_space<vmem>>, %arg2: memref<43x128xf32, #tpu.memory_space<vmem>>, %arg3: memref<1x2xf32, #tpu.memory_space<vmem>>) attributes {dimension_semantics = [], scalar_prefetch = 0 : i64, scratch_operands = 0 : i64, tpu.core_type = #tpu.core_type<tc>} {
    %c0 = arith.constant 0 : index
    %c0_0 = arith.constant 0 : index
    %0 = vector.load %arg0[%c0, %c0_0] : memref<2x8xf32, #tpu.memory_space<vmem>>, vector<2x8xf32>
    %c0_1 = arith.constant 0 : index
    %c0_2 = arith.constant 0 : index
    %c0_3 = arith.constant 0 : index
    %1 = vector.load %arg1[%c0_1, %c0_2, %c0_3] : memref<1x2x32xf32, #tpu.memory_space<vmem>>, vector<1x2x32xf32>
    %2 = vector.shape_cast %1 : vector<1x2x32xf32> to vector<2x32xf32>
    %c0_4 = arith.constant 0 : index
    %c0_5 = arith.constant 0 : index
    %3 = vector.load %arg2[%c0_4, %c0_5] : memref<43x128xf32, #tpu.memory_space<vmem>>, vector<8x128xf32>
    %c8 = arith.constant 8 : index
    %c0_6 = arith.constant 0 : index
    %4 = vector.load %arg2[%c8, %c0_6] : memref<43x128xf32, #tpu.memory_space<vmem>>, vector<32x128xf32>
    %c40 = arith.constant 40 : index
    %c0_7 = arith.constant 0 : index
    %5 = vector.load %arg2[%c40, %c0_7] : memref<43x128xf32, #tpu.memory_space<vmem>>, vector<1x128xf32>
    %c41 = arith.constant 41 : index
    %c0_8 = arith.constant 0 : index
    %6 = vector.load %arg2[%c41, %c0_8] : memref<43x128xf32, #tpu.memory_space<vmem>>, vector<1x32xf32>
    %c42 = arith.constant 42 : index
    %c0_9 = arith.constant 0 : index
    %7 = vector.load %arg2[%c42, %c0_9] : memref<43x128xf32, #tpu.memory_space<vmem>>, vector<1x1xf32>
    %cst = arith.constant dense<0.000000e+00> : vector<2x128xf32>
    %8 = tpu.matmul %0, %3, %cst {dimension_numbers = #tpu.dot_dimension_numbers<[1], [0], [0], [1], [0, 0, 1, 1], [], []>} : vector<2x8xf32>, vector<8x128xf32>, vector<2x128xf32> -> vector<2x128xf32>
    %cst_10 = arith.constant dense<0.000000e+00> : vector<2x128xf32>
    %9 = tpu.matmul %2, %4, %cst_10 {dimension_numbers = #tpu.dot_dimension_numbers<[1], [0], [0], [1], [0, 0, 1, 1], [], []>} : vector<2x32xf32>, vector<32x128xf32>, vector<2x128xf32> -> vector<2x128xf32>
    %10 = arith.addf %8, %9 : vector<2x128xf32>
    %11 = vector.broadcast %5 : vector<1x128xf32> to vector<2x128xf32>
    %12 = arith.addf %10, %11 : vector<2x128xf32>
    %13 = vector.extract_strided_slice %12 {offsets = [0, 0], sizes = [2, 64], strides = [1, 1]} : vector<2x128xf32> to vector<2x64xf32>
    %14 = arith.negf %13 : vector<2x64xf32>
    %15 = math.exp %14 : vector<2x64xf32>
    %cst_11 = arith.constant 1.000000e+00 : f32
    %16 = vector.broadcast %cst_11 : f32 to vector<2x64xf32>
    %17 = arith.addf %16, %15 : vector<2x64xf32>
    %18 = arith.divf %16, %17 : vector<2x64xf32>
    %19 = vector.extract_strided_slice %18 {offsets = [0, 0], sizes = [2, 32], strides = [1, 1]} : vector<2x64xf32> to vector<2x32xf32>
    %20 = vector.extract_strided_slice %18 {offsets = [0, 32], sizes = [2, 32], strides = [1, 1]} : vector<2x64xf32> to vector<2x32xf32>
    %21 = vector.extract_strided_slice %12 {offsets = [0, 64], sizes = [2, 32], strides = [1, 1]} : vector<2x128xf32> to vector<2x32xf32>
    %22 = vector.extract_strided_slice %12 {offsets = [0, 96], sizes = [2, 32], strides = [1, 1]} : vector<2x128xf32> to vector<2x32xf32>
    %23 = arith.mulf %19, %22 : vector<2x32xf32>
    %24 = arith.addf %21, %23 : vector<2x32xf32>
    %25 = math.tanh %24 : vector<2x32xf32>
    %cst_12 = arith.constant 1.000000e+00 : f32
    %26 = vector.broadcast %cst_12 : f32 to vector<2x32xf32>
    %27 = arith.subf %26, %20 : vector<2x32xf32>
    %28 = arith.mulf %27, %25 : vector<2x32xf32>
    %29 = arith.mulf %20, %2 : vector<2x32xf32>
    %30 = arith.addf %28, %29 : vector<2x32xf32>
    %31 = tpu.transpose %30, [1, 0] : vector<2x32xf32> -> vector<32x2xf32>
    %cst_13 = arith.constant dense<0.000000e+00> : vector<1x2xf32>
    %32 = tpu.matmul %6, %31, %cst_13 {dimension_numbers = #tpu.dot_dimension_numbers<[1], [0], [0], [1], [0, 0, 1, 1], [], []>} : vector<1x32xf32>, vector<32x2xf32>, vector<1x2xf32> -> vector<1x2xf32>
    %33 = vector.broadcast %7 : vector<1x1xf32> to vector<1x2xf32>
    %34 = arith.addf %32, %33 : vector<1x2xf32>
    %c0_14 = arith.constant 0 : index
    %c0_15 = arith.constant 0 : index
    %35 = vector.load %arg3[%c0_14, %c0_15] : memref<1x2xf32, #tpu.memory_space<vmem>>, vector<1x2xf32>
    tpu.vector_store %arg3[%c0_14, %c0_15], %34 {strides = array<i32>} : memref<1x2xf32, #tpu.memory_space<vmem>>, vector<1x2xf32>,
    return
  }
}

</mosaic_0001>

<llo_original>
// kernel: critic_forward.1
$region0: #{critic_forward.1}
  #allocation0 [shape = 'u32[]', space=smem, size = 0x4, offset = 0x4, fixed_abs, tag = 'smem constant byte address 0x4 - core index']
  #allocation1 [shape = 'u32[144,128]{1,0:T(1,128)}', space=vmem, size = 0x12000, scoped, tag = 'internal scratch']
  %s0 = inlined_call_operand.hbm [shape: f32[2,8], index: 0, kind: input, shape index: {}]
  %s1 = inlined_call_operand.hbm [shape: f32[1,2,32], index: 1, kind: input, shape index: {}]
  %s2 = inlined_call_operand.hbm [shape: f32[43,128], index: 2, kind: input, shape index: {}]
  %s3 = inlined_call_operand.hbm [shape: f32[1,2], index: 3, kind: output, shape index: {}]
  %s4 = sld [smem:[#allocation0]]
  $region34: #{critic_forward.1} parent=0
    _
  %s6 = ssub.s32 1, %s4
  %s7 = scalar_select 0, %s6, %s4
  $region1: #{critic_forward.1} parent=0
    #allocation2 [shape = 'u8[1024]{0}', space=vmem, size = 0x400, scoped, tag = 'input window, operand 0, single buffered']
    #allocation3 [shape = 's32[1]{0}', space=sflag, size = 0x4, scoped, tag = 'scoped memory for critic_forward.1']
    #allocation4 [shape = 's32[1]{0}', space=sflag, size = 0x4, scoped, tag = 'scoped memory for critic_forward.1']
    #allocation5 [shape = 'u8[1024]{0}', space=vmem, size = 0x400, scoped, tag = 'input window, operand 1, single buffered']
    #allocation6 [shape = 's32[1]{0}', space=sflag, size = 0x4, scoped, tag = 'scoped memory for critic_forward.1']
    #allocation7 [shape = 'u8[24576]{0}', space=vmem, size = 0x6000, scoped, tag = 'input window, operand 2, single buffered']
    #allocation8 [shape = 'u8[512]{0}', space=vmem, size = 0x400, scoped, tag = 'output window, operand 0, single buffered']
    %8 = vsyncpa [#allocation3], 0
    %9 = vsyncpa [#allocation6], 0
    %10 = vsyncpa [#allocation4], 0
    // Predicated region
    $region2: #{critic_forward.1} parent=1 // pred_check
      _
    $region3: #{critic_forward.1} parent=1 // pred_check_branch
      %12 = sbr.rel (0) target = $region5
    $region4: #{critic_forward.1} parent=1 // pred_region
      %s14 = ssub.s32 32, 32
      %15 = vsyncadd [#allocation3], %s14
      %s17 = sshll.u32 [#allocation2], 4
      %s18 = int_to_ptr.vmem [resolvable:$true] %s17
      %20 = dma.hbm_to_vmem [thread:$0]  %s0, 32, %s18, [#allocation3]
    $region5: #{critic_forward.1} parent=1 // pred_fallthru
      _
    // Predicated region
    $region6: #{critic_forward.1} parent=1 // pred_check
      _
    $region7: #{critic_forward.1} parent=1 // pred_check_branch
      %22 = sbr.rel (0) target = $region9
    $region8: #{critic_forward.1} parent=1 // pred_region
      %s24 = ssub.s32 32, 32
      %25 = vsyncadd [#allocation6], %s24
      %s27 = sshll.u32 [#allocation5], 4
      %s28 = int_to_ptr.vmem [resolvable:$true] %s27
      %30 = dma.hbm_to_vmem [thread:$0]  %s1, 32, %s28, [#allocation6]
    $region9: #{critic_forward.1} parent=1 // pred_fallthru
      _
    // Predicated region
    $region10: #{critic_forward.1} parent=1 // pred_check
      _
    $region11: #{critic_forward.1} parent=1 // pred_check_branch
      %32 = sbr.rel (0) target = $region13
    $region12: #{critic_forward.1} parent=1 // pred_region
      %s34 = ssub.s32 768, 768
      %35 = vsyncadd [#allocation6], %s34
      %s36 = sshll.u32 [#allocation7], 4
      %s37 = int_to_ptr.vmem [resolvable:$true] %s36
      %42 = dma.hbm_to_vmem [thread:$0]  %s2, 768, %s37, [#allocation6], 128, 128, 8
    $region13: #{critic_forward.1} parent=1 // pred_fallthru
      _
    // Predicated region
    $region14: #{critic_forward.1} parent=1 // pred_check
      _
    $region15: #{critic_forward.1} parent=1 // pred_check_branch
      %44 = sbr.rel (0) target = $region17
    $region16: #{critic_forward.1} parent=1 // pred_region
      %45 = dma.done [#allocation3], 32
    $region17: #{critic_forward.1} parent=1 // pred_fallthru
      _
    // Predicated region
    $region18: #{critic_forward.1} parent=1 // pred_check
      _
    $region19: #{critic_forward.1} parent=1 // pred_check_branch
      %47 = sbr.rel (0) target = $region21
    $region20: #{critic_forward.1} parent=1 // pred_region
      %48 = dma.done [#allocation6], 32
    $region21: #{critic_forward.1} parent=1 // pred_fallthru
      _
    // Predicated region
    $region22: #{critic_forward.1} parent=1 // pred_check
      _
    $region23: #{critic_forward.1} parent=1 // pred_check_branch
      %50 = sbr.rel (0) target = $region25
    $region24: #{critic_forward.1} parent=1 // pred_region
      %51 = dma.done [#allocation6], 768
    $region25: #{critic_forward.1} parent=1 // pred_fallthru
      _
    %v52 = vld [vmem:[#allocation2] sm:$0x3]
    %v53 = vld [vmem:[#allocation5] sm:$0x3]
    %v54 = vld [vmem:[#allocation7] sm:$0xff]
    %v55 = vld [vmem:[#allocation7 + $0x8] sm:$0xff]
    %v56 = vld [vmem:[#allocation7 + $0x10] sm:$0xff]
    %v57 = vld [vmem:[#allocation7 + $0x18] sm:$0xff]
    %v58 = vld [vmem:[#allocation7 + $0x20] sm:$0xff]
    %v59 = vld [vmem:[#allocation7 + $0x28] sm:$0x1]
    %v60 = vld [vmem:[#allocation7 + $0x29] sm:$0x1]
    %v61 = vld [vmem:[#allocation7 + $0x2a] sm:$0x1]
    %vm62 = vcmask 261120
    %v64 = vsel %vm62, %v53, 0
    %66 = vmatprep.subr.mxu0 0.0
    %67 = vmatpush1.msra.mxu0 0.0
    %68 = vmatprep.subr.mxu0 0.0
    %69 = vmatpush1.msra.mxu0 0.0
    %70 = vmatprep.subr.mxu0 0.0
    %71 = vmatpush1.msra.mxu0 0.0
    %72 = vmatprep.subr.mxu0 0.0
    %73 = vmatpush1.msra.mxu0 0.0
    %74 = vmatprep.subr.mxu0 0.0
    %75 = vmatpush1.msra.mxu0 0.0
    %76 = vmatprep.subr.mxu0 0.0
    %77 = vmatpush1.msra.mxu0 0.0
    %78 = vmatprep.subr.mxu0 0.0
    %79 = vmatpush1.msra.mxu0 0.0
    %80 = vmatprep.subr.mxu0 0.0
    %81 = vmatpush1.msra.mxu0 0.0
    %82 = vmatprep.subr.mxu0 0.0
    %83 = vmatpush1.msra.mxu0 0.0
    %84 = vmatprep.subr.mxu0 0.0
    %85 = vmatpush1.msra.mxu0 0.0
    %86 = vmatprep.subr.mxu0 0.0
    %87 = vmatpush1.msra.mxu0 0.0
    %88 = vmatprep.subr.mxu0 0.0
    %89 = vmatpush1.msra.mxu0 0.0
    %90 = vmatprep.subr.mxu0 0.0
    %91 = vmatpush1.msra.mxu0 %v58
    %92 = vmatprep.subr.mxu0 0.0
    %93 = vmatpush1.msra.mxu0 %v57
    %94 = vmatprep.subr.mxu0 0.0
    %95 = vmatpush1.msra.mxu0 %v56
    %96 = vmatprep.subr.mxu0 0.0
    %97 = vmatpush1.msra.mxu0 %v55
    %98 = vmatprep.subr.mxu0 0.0
    %99 = vmatpush2.msra.mxu0 0.0
    %100 = vmatprep.subr.mxu0 0.0
    %101 = vmatpush2.msra.mxu0 0.0
    %102 = vmatprep.subr.mxu0 0.0
    %103 = vmatpush2.msra.mxu0 0.0
    %104 = vmatprep.subr.mxu0 0.0
    %105 = vmatpush2.msra.mxu0 0.0
    %106 = vmatprep.subr.mxu0 0.0
    %107 = vmatpush2.msra.mxu0 0.0
    %108 = vmatprep.subr.mxu0 0.0
    %109 = vmatpush2.msra.mxu0 0.0
    %110 = vmatprep.subr.mxu0 0.0
    %111 = vmatpush2.msra.mxu0 0.0
    %112 = vmatprep.subr.mxu0 0.0
    %113 = vmatpush2.msra.mxu0 0.0
    %114 = vmatprep.subr.mxu0 0.0
    %115 = vmatpush2.msra.mxu0 0.0
    %116 = vmatprep.subr.mxu0 0.0
    %117 = vmatpush2.msra.mxu0 0.0
    %118 = vmatprep.subr.mxu0 0.0
    %119 = vmatpush2.msra.mxu0 0.0
    %120 = vmatprep.subr.mxu0 0.0
    %121 = vmatpush2.msra.mxu0 0.0
    %122 = vmatprep.subr.mxu0 0.0
    %123 = vmatpush2.msra.mxu0 0.0
    %124 = vmatprep.subr.mxu0 0.0
    %125 = vmatpush2.msra.mxu0 0.0
    %126 = vmatprep.subr.mxu0 0.0
    %127 = vmatpush2.msra.mxu0 0.0
    %128 = vmatprep.subr.mxu0 0.0
    %129 = vmatpush2.msra.mxu0 0.0
    %130 = vmatprep.mubr.f32.mxu0 0.0
    %131 = vmatmul.mubr.f32.gmra.mxu0 %v64
    %v132 = vpop.f32.mrf.mxu0
    %v133 = vadd.f32 0.0, %v132
    %v134 = vpop.f32.mrf.mxu0
    %135 = vdwg.mxu0
    %vm136 = vcmask 64512
    %v138 = vsel %vm136, %v52, 0
    %140 = vmatprep.subr.mxu0 0.0
    %141 = vmatpush1.msra.mxu0 0.0
    %142 = vmatprep.subr.mxu0 0.0
    %143 = vmatpush1.msra.mxu0 0.0
    %144 = vmatprep.subr.mxu0 0.0
    %145 = vmatpush1.msra.mxu0 0.0
    %146 = vmatprep.subr.mxu0 0.0
    %147 = vmatpush1.msra.mxu0 0.0
    %148 = vmatprep.subr.mxu0 0.0
    %149 = vmatpush1.msra.mxu0 0.0
    %150 = vmatprep.subr.mxu0 0.0
    %151 = vmatpush1.msra.mxu0 0.0
    %152 = vmatprep.subr.mxu0 0.0
    %153 = vmatpush1.msra.mxu0 0.0
    %154 = vmatprep.subr.mxu0 0.0
    %155 = vmatpush1.msra.mxu0 0.0
    %156 = vmatprep.subr.mxu0 0.0
    %157 = vmatpush1.msra.mxu0 0.0
    %158 = vmatprep.subr.mxu0 0.0
    %159 = vmatpush1.msra.mxu0 0.0
    %160 = vmatprep.subr.mxu0 0.0
    %161 = vmatpush1.msra.mxu0 0.0
    %162 = vmatprep.subr.mxu0 0.0
    %163 = vmatpush1.msra.mxu0 0.0
    %164 = vmatprep.subr.mxu0 0.0
    %165 = vmatpush1.msra.mxu0 0.0
    %166 = vmatprep.subr.mxu0 0.0
    %167 = vmatpush1.msra.mxu0 0.0
    %168 = vmatprep.subr.mxu0 0.0
    %169 = vmatpush1.msra.mxu0 0.0
    %170 = vmatprep.subr.mxu0 0.0
    %171 = vmatpush1.msra.mxu0 %v54
    %172 = vmatprep.subr.mxu0 0.0
    %173 = vmatpush2.msra.mxu0 0.0
    %174 = vmatprep.subr.mxu0 0.0
    %175 = vmatpush2.msra.mxu0 0.0
    %176 = vmatprep.subr.mxu0 0.0
    %177 = vmatpush2.msra.mxu0 0.0
    %178 = vmatprep.subr.mxu0 0.0
    %179 = vmatpush2.msra.mxu0 0.0
    %180 = vmatprep.subr.mxu0 0.0
    %181 = vmatpush2.msra.mxu0 0.0
    %182 = vmatprep.subr.mxu0 0.0
    %183 = vmatpush2.msra.mxu0 0.0
    %184 = vmatprep.subr.mxu0 0.0
    %185 = vmatpush2.msra.mxu0 0.0
    %186 = vmatprep.subr.mxu0 0.0
    %187 = vmatpush2.msra.mxu0 0.0
    %188 = vmatprep.subr.mxu0 0.0
    %189 = vmatpush2.msra.mxu0 0.0
    %190 = vmatprep.subr.mxu0 0.0
    %191 = vmatpush2.msra.mxu0 0.0
    %192 = vmatprep.subr.mxu0 0.0
    %193 = vmatpush2.msra.mxu0 0.0
    %194 = vmatprep.subr.mxu0 0.0
    %195 = vmatpush2.msra.mxu0 0.0
    %196 = vmatprep.subr.mxu0 0.0
    %197 = vmatpush2.msra.mxu0 0.0
    %198 = vmatprep.subr.mxu0 0.0
    %199 = vmatpush2.msra.mxu0 0.0
    %200 = vmatprep.subr.mxu0 0.0
    %201 = vmatpush2.msra.mxu0 0.0
    %202 = vmatprep.subr.mxu0 0.0
    %203 = vmatpush2.msra.mxu0 0.0
    %204 = vmatprep.mubr.f32.mxu0 0.0
    %205 = vmatmul.mubr.f32.gmra.mxu0 %v138
    %v206 = vpop.f32.mrf.mxu0
    %v207 = vadd.f32 %v133, %v206
    %v208 = vpop.f32.mrf.mxu0
    %209 = vdwg.mxu0
    %v210 = vlaneseq
    %v211 = vshrl.u32 %v210, 7
    %v212 = vsub.s32 0, %v211
    %v213 = vrot.slane %v59, %v212
    %v214 = vadd.f32 %v207, %v213
    %v215 = vxor.u32 %v214, 2147483648
    %v216 = vmul.f32 %v215, 1.442695
    %v217 = vpow.pop %v216
    %v218 = vadd.f32 %v217, 1.0
    %v219 = vrcp.pop %v218
    %v220 = vmul.f32 1.0, %v219
    %222 = vrot.lane.b32.xlu0 %v214, 32
    %v223 = vpop.permute.xlu0 %222
    %v225 = vmul.f32 %v220, %v223
    %227 = vrot.lane.b32.xlu0 %v225, 64
    %v228 = vpop.permute.xlu0 %227
    %v230 = vadd.f32 %v214, %v228
    %v231 = vtanh.pop %v230
    %v232 = vsub.f32 1.0, %v220
    %234 = vrot.lane.b32.xlu0 %v231, 96
    %v235 = vpop.permute.xlu0 %234
    %v237 = vmul.f32 %v232, %v235
    %238 = vrot.lane.b32.xlu0 %v53, 32
    %v239 = vpop.permute.xlu0 %238
    %v241 = vmul.f32 %v220, %v239
    %v242 = vadd.f32 %v237, %v241
    %244 = vset.pattern.permute.xlu0 0
    %245 = vperm.xlu0 %244, %v61
    %v246 = vpop.permute.xlu0 %245
    %249 = vrot.lane.b32.xlu0 %v242, 96
    %v250 = vpop.permute.xlu0 %249
    %v252 = vsel %vm62, %v60, 0
    %v254 = vsel %vm62, %v250, 0
    %256 = vmatprep.subr.mxu0 0.0
    %257 = vmatpush1.xpose.msra.mxu0 0.0
    %258 = vmatprep.subr.mxu0 0.0
    %259 = vmatpush1.xpose.msra.mxu0 0.0
    %260 = vmatprep.subr.mxu0 0.0
    %261 = vmatpush1.xpose.msra.mxu0 0.0
    %262 = vmatprep.subr.mxu0 0.0
    %263 = vmatpush1.xpose.msra.mxu0 0.0
    %264 = vmatprep.subr.mxu0 0.0
    %265 = vmatpush1.xpose.msra.mxu0 0.0
    %266 = vmatprep.subr.mxu0 0.0
    %267 = vmatpush1.xpose.msra.mxu0 0.0
    %268 = vmatprep.subr.mxu0 0.0
    %269 = vmatpush1.xpose.msra.mxu0 0.0
    %270 = vmatprep.subr.mxu0 0.0
    %271 = vmatpush1.xpose.msra.mxu0 0.0
    %272 = vmatprep.subr.mxu0 0.0
    %273 = vmatpush1.xpose.msra.mxu0 0.0
    %274 = vmatprep.subr.mxu0 0.0
    %275 = vmatpush1.xpose.msra.mxu0 0.0
    %276 = vmatprep.subr.mxu0 0.0
    %277 = vmatpush1.xpose.msra.mxu0 0.0
    %278 = vmatprep.subr.mxu0 0.0
    %279 = vmatpush1.xpose.msra.mxu0 0.0
    %280 = vmatprep.subr.mxu0 0.0
    %281 = vmatpush1.xpose.msra.mxu0 0.0
    %282 = vmatprep.subr.mxu0 0.0
    %283 = vmatpush1.xpose.msra.mxu0 0.0
    %284 = vmatprep.subr.mxu0 0.0
    %285 = vmatpush1.xpose.msra.mxu0 0.0
    %286 = vmatprep.subr.mxu0 0.0
    %287 = vmatpush1.xpose.msra.mxu0 %v254
    %288 = vmatprep.subr.mxu0 0.0
    %289 = vmatpush2.xpose.msra.mxu0 0.0
    %290 = vmatprep.subr.mxu0 0.0
    %291 = vmatpush2.xpose.msra.mxu0 0.0
    %292 = vmatprep.subr.mxu0 0.0
    %293 = vmatpush2.xpose.msra.mxu0 0.0
    %294 = vmatprep.subr.mxu0 0.0
    %295 = vmatpush2.xpose.msra.mxu0 0.0
    %296 = vmatprep.subr.mxu0 0.0
    %297 = vmatpush2.xpose.msra.mxu0 0.0
    %298 = vmatprep.subr.mxu0 0.0
    %299 = vmatpush2.xpose.msra.mxu0 0.0
    %300 = vmatprep.subr.mxu0 0.0
    %301 = vmatpush2.xpose.msra.mxu0 0.0
    %302 = vmatprep.subr.mxu0 0.0
    %303 = vmatpush2.xpose.msra.mxu0 0.0
    %304 = vmatprep.subr.mxu0 0.0
    %305 = vmatpush2.xpose.msra.mxu0 0.0
    %306 = vmatprep.subr.mxu0 0.0
    %307 = vmatpush2.xpose.msra.mxu0 0.0
    %308 = vmatprep.subr.mxu0 0.0
    %309 = vmatpush2.xpose.msra.mxu0 0.0
    %310 = vmatprep.subr.mxu0 0.0
    %311 = vmatpush2.xpose.msra.mxu0 0.0
    %312 = vmatprep.subr.mxu0 0.0
    %313 = vmatpush2.xpose.msra.mxu0 0.0
    %314 = vmatprep.subr.mxu0 0.0
    %315 = vmatpush2.xpose.msra.mxu0 0.0
    %316 = vmatprep.subr.mxu0 0.0
    %317 = vmatpush2.xpose.msra.mxu0 0.0
    %318 = vmatprep.subr.mxu0 0.0
    %319 = vmatpush2.xpose.msra.mxu0 0.0
    %320 = vmatprep.mubr.f32.mxu0 0.0
    %321 = vmatmul.mubr.f32.gmra.mxu0 %v252
    %v322 = vpop.f32.mrf.mxu0
    %v323 = vadd.f32 %v246, %v322
    %v324 = vpop.f32.mrf.mxu0
    %325 = vdwg.mxu0
    %vm326 = vcmask 8192
    %327 = vst.msk [vmem:[#allocation8] sm:$0x1] %vm326, %v323
    // Predicated region
    $region26: #{critic_forward.1} parent=1 // pred_check
      _
    $region27: #{critic_forward.1} parent=1 // pred_check_branch
      %329 = sbr.rel (0) target = $region29
    $region28: #{critic_forward.1} parent=1 // pred_region
      %s331 = ssub.s32 16, 16
      %332 = vsyncadd [#allocation4], %s331
      %s334 = sshll.u32 [#allocation8], 4
      %s335 = int_to_ptr.vmem [resolvable:$true] %s334
      %337 = dma.vmem_to_hbm [thread:$0]  %s335, 16, %s3, [#allocation4]
    $region29: #{critic_forward.1} parent=1 // pred_fallthru
      _
    // Predicated region
    $region30: #{critic_forward.1} parent=1 // pred_check
      _
    $region31: #{critic_forward.1} parent=1 // pred_check_branch
      %339 = sbr.rel (0) target = $region33
    $region32: #{critic_forward.1} parent=1 // pred_region
      %340 = dma.done [#allocation4], 16
    $region33: #{critic_forward.1} parent=1 // pred_fallthru
      _
    %341 = vsyncpa [#allocation3], 1
    %342 = vsyncpa [#allocation6], 1
    %343 = vsyncpa [#allocation4], 1

</llo_original>
